<compile_context>
chip_gen: v6e
topology: v6e:2x2x1
jax: 0.10.0
libtpu: 0.0.40
codegen_flags: <defaults>
</compile_context>

<pallas_src>
import jax
import jax.numpy as jnp
from jax.experimental import pallas as pl
from jax.experimental.pallas import tpu as pltpu


def critic_kernel(s_ref, a_ref, w1s_ref, w1a_ref, b1_ref, w2_ref, b2_ref,
                  w3_ref, b3_ref, o_ref):
    # Matmul operand dtype is whatever the wrapper pre-cast the weights to
    # (bf16 by default, f32 for exact parity).  Accumulation is always f32.
    mm_dtype = w1s_ref.dtype
    s = s_ref[...].astype(mm_dtype)
    a = a_ref[...].astype(mm_dtype)

    # Layer 1 (fused concat): [s, a] @ W1 == s @ W1[:s_dim] + a @ W1[s_dim:].
    h1 = (jnp.dot(s, w1s_ref[...], preferred_element_type=jnp.float32)
          + jnp.dot(a, w1a_ref[...], preferred_element_type=jnp.float32)
          + b1_ref[...])
    h1 = jnp.maximum(h1, 0.0)              # bias-add / ReLU stay in f32

    # Layer 2.
    h2 = jnp.dot(h1.astype(mm_dtype), w2_ref[...],
                 preferred_element_type=jnp.float32) + b2_ref[...]
    h2 = jnp.maximum(h2, 0.0)

    # Layer 3 (N=1): VPU mul + XLU lane-reduce instead of a 1-wide MXU pass;
    # b3 is a scalar read from SMEM.
    q = jnp.sum(h2 * w3_ref[...], axis=-1, keepdims=True) + b3_ref[0, 0]
    o_ref[...] = q.astype(o_ref.dtype)


def _round_up(x, m):
    return ((x + m - 1) // m) * m


def _vmem_tile_bytes(rows, cols, itemsize):
    """Bytes of a 2-D tile after (8, 128) layout padding."""
    return _round_up(max(rows, 1), 8) * _round_up(max(cols, 1), 128) * itemsize


def critic_forward(s, a, params, *, use_bf16_matmul=True):
    """Pallas forward for Critic: q = MLP(cat([s, a], dim=1)).

    s: [..., s_dim], a: [..., a_dim]; leading dims flattened like torch's
    .view(-1, dim).  Returns [B, 1] float32.
    """
    w1, b1, w2, b2, w3, b3 = params
    s_dim = s.shape[-1]
    a_dim = a.shape[-1]
    hidden = w1.shape[1]

    s2 = s.reshape(-1, s_dim).astype(jnp.float32)
    a2 = a.reshape(-1, a_dim).astype(jnp.float32)
    B = s2.shape[0]

    # --- weight / bias preparation (done once per call, outside the kernel) -
    mm_dtype = jnp.bfloat16 if use_bf16_matmul else jnp.float32
    w_itemsize = jnp.dtype(mm_dtype).itemsize

    w1f = jnp.asarray(w1, jnp.float32)
    w1_s = w1f[:s_dim].astype(mm_dtype)          # (s_dim, H) pre-cast
    w1_a = w1f[s_dim:].astype(mm_dtype)          # (a_dim, H) pre-cast
    w2_m = jnp.asarray(w2, jnp.float32).astype(mm_dtype)   # (H, H) pre-cast
    # Biases and the final (VPU) layer stay f32; accept (H,) or (1, H).
    b1_r = jnp.asarray(b1, jnp.float32).reshape(1, hidden)
    b2_r = jnp.asarray(b2, jnp.float32).reshape(1, hidden)
    w3_row = jnp.asarray(w3, jnp.float32).reshape(1, hidden)
    b3_s = jnp.asarray(b3, jnp.float32).reshape(1, 1)

    # --- batch tiling ---------------------------------------------------
    # Multiple of 8, capped at 1024; for B > 8 force >= 2 tiles so the
    # "parallel" batch axis can shard across both v7x TensorCores.
    TB_CAP = 1024
    if B <= 8:
        TB = _round_up(B, 8)
    else:
        TB = min(TB_CAP, _round_up(-(-B // 2), 8))
    TB = max(TB, 8)
    grid_b = pl.cdiv(B, TB)

    # --- explicit scoped-VMEM budget --------------------------------------
    resident = (_vmem_tile_bytes(s_dim, hidden, w_itemsize)      # W1_s
                + _vmem_tile_bytes(a_dim, hidden, w_itemsize)    # W1_a
                + _vmem_tile_bytes(hidden, hidden, w_itemsize)   # W2
                + 3 * _vmem_tile_bytes(1, hidden, 4))            # b1, b2, w3
    streamed = 2 * (_vmem_tile_bytes(TB, s_dim, 4)               # s (dbl-buf)
                    + _vmem_tile_bytes(TB, a_dim, 4)             # a (dbl-buf)
                    + _vmem_tile_bytes(TB, 1, 4))                # q (dbl-buf)
    intermediates = 3 * _vmem_tile_bytes(TB, hidden, 4)          # h1/h2 spill
    vmem_limit = int(1.5 * (resident + streamed + intermediates)) + (1 << 20)
    vmem_limit = min(max(vmem_limit, 8 << 20), 64 << 20)

    flops = 2 * B * ((s_dim + a_dim) * hidden + hidden * hidden + hidden)
    bytes_accessed = (4 * B * (s_dim + a_dim + 1)
                      + w_itemsize * ((s_dim + a_dim) * hidden + hidden * hidden)
                      + 4 * (3 * hidden + 1))

    row_spec = lambda d: pl.BlockSpec((TB, d), lambda i: (i, 0))
    # Resident (single-buffered) constant blocks: same tile every grid step.
    const_spec = lambda arr: pl.BlockSpec(arr.shape, lambda i: (0, 0),
                                          pipeline_mode=pl.Buffered(1))

    return pl.pallas_call(
        critic_kernel,
        out_shape=jax.ShapeDtypeStruct((B, 1), jnp.float32),
        grid_spec=pltpu.PrefetchScalarGridSpec(
            num_scalar_prefetch=0,
            grid=(grid_b,),
            in_specs=[
                row_spec(s_dim),                     # s rows (streamed)
                row_spec(a_dim),                     # a rows (streamed)
                const_spec(w1_s),                    # W1[:s_dim]  (resident)
                const_spec(w1_a),                    # W1[s_dim:]  (resident)
                const_spec(b1_r),                    # (1, H)      (resident)
                const_spec(w2_m),                    # (H, H)      (resident)
                const_spec(b2_r),                    # (1, H)      (resident)
                const_spec(w3_row),                  # (1, H)      (resident)
                pl.BlockSpec(memory_space=pltpu.MemorySpace.SMEM),  # b3 scalar
            ],
            out_specs=pl.BlockSpec((TB, 1), lambda i: (i, 0)),
        ),
        compiler_params=pltpu.CompilerParams(
            dimension_semantics=("parallel",),
            vmem_limit_bytes=vmem_limit),
        cost_estimate=pl.CostEstimate(
            flops=flops, transcendentals=0, bytes_accessed=bytes_accessed),
    )(s2, a2, w1_s, w1_a, b1_r, w2_m, b2_r, w3_row, b3_s)


def init_critic_params(key, s_dim, a_dim, hidden_dim):
    """Deterministic init mimicking PyTorch nn.Linear default U(-1/sqrt(fan_in), +)."""
    dims = [(s_dim + a_dim, hidden_dim), (hidden_dim, hidden_dim), (hidden_dim, 1)]
    params = []
    for (fan_in, fan_out) in dims:
        key, kw, kb = jax.random.split(key, 3)
        bound = 1.0 / jnp.sqrt(float(fan_in))
        w = jax.random.uniform(kw, (fan_in, fan_out), jnp.float32, -bound, bound)
        b = jax.random.uniform(kb, (1, fan_out), jnp.float32, -bound, bound)
        params += [w, b]
    return tuple(params)


def critic_reference(s, a, params):
    """Pure-JAX reference for correctness check."""
    w1, b1, w2, b2, w3, b3 = params
    x = jnp.concatenate(
        [s.reshape(-1, s.shape[-1]), a.reshape(-1, a.shape[-1])], axis=1)
    h1 = jnp.maximum(x @ w1 + b1, 0.0)
    h2 = jnp.maximum(h1 @ w2 + b2, 0.0)
    return h2 @ w3 + b3


if __name__ == "__main__":
    key = jax.random.PRNGKey(0)
    B, S_DIM, A_DIM, HIDDEN = 8, 16, 8, 32

    k_s, k_a, k_p, k_s2, k_a2 = jax.random.split(key, 5)
    s = jax.random.normal(k_s, (B, S_DIM), jnp.float32)
    a = jax.random.normal(k_a, (B, A_DIM), jnp.float32)
    params = init_critic_params(k_p, S_DIM, A_DIM, HIDDEN)
    q_ref = critic_reference(s, a, params)

    # Small batch, exact f32 path (single grid step).
    q_f32 = critic_forward(s, a, params, use_bf16_matmul=False)
    jax.block_until_ready(q_f32)
    assert q_f32.shape == (B, 1), q_f32.shape
    assert jnp.allclose(q_f32, q_ref, atol=1e-4, rtol=1e-4), (q_f32, q_ref)

    # Small batch, default bf16-matmul path (f32 accumulation) -- looser tol.
    q_bf16 = critic_forward(s, a, params)
    jax.block_until_ready(q_bf16)
    assert jnp.allclose(q_bf16, q_ref, atol=5e-2, rtol=5e-2), (q_bf16, q_ref)

    # Larger batch: exercises the multi-tile batch grid (>= 2 tiles, both
    # TCs on v7x), single-buffered resident weights and the masked ragged
    # last tile (B not a multiple of the row tile).
    B2 = 1000
    s_l = jax.random.normal(k_s2, (B2, S_DIM), jnp.float32)
    a_l = jax.random.normal(k_a2, (B2, A_DIM), jnp.float32)
    q_l_ref = critic_reference(s_l, a_l, params)

    q_l_f32 = critic_forward(s_l, a_l, params, use_bf16_matmul=False)
    jax.block_until_ready(q_l_f32)
    assert q_l_f32.shape == (B2, 1), q_l_f32.shape
    assert jnp.allclose(q_l_f32, q_l_ref, atol=1e-4, rtol=1e-4)

    q_l_bf16 = critic_forward(s_l, a_l, params)
    jax.block_until_ready(q_l_bf16)
    assert jnp.allclose(q_l_bf16, q_l_ref, atol=5e-2, rtol=5e-2)

    print("KERNEL_OK")
</pallas_src>

<mosaic_0001>
module attributes {stable_mosaic.version = 11 : i64} {
  func.func @critic_kernel(%arg0: i32, %arg1: memref<8x16xf32, #tpu.memory_space<vmem>>, %arg2: memref<8x8xf32, #tpu.memory_space<vmem>>, %arg3: memref<16x32xf32, #tpu.memory_space<vmem>>, %arg4: memref<8x32xf32, #tpu.memory_space<vmem>>, %arg5: memref<1x32xf32, #tpu.memory_space<vmem>>, %arg6: memref<32x32xf32, #tpu.memory_space<vmem>>, %arg7: memref<1x32xf32, #tpu.memory_space<vmem>>, %arg8: memref<1x32xf32, #tpu.memory_space<vmem>>, %arg9: memref<1x1xf32, #tpu.memory_space<smem>>, %arg10: memref<8x1xf32, #tpu.memory_space<vmem>>) attributes {dimension_semantics = [#tpu.dimension_semantics<parallel>], iteration_bounds = array<i64: 1>, scalar_prefetch = 0 : i64, scratch_operands = 0 : i64, tpu.core_type = #tpu.core_type<tc>, window_params = [{transform_indices = @transform_0, window_bounds = array<i64: 8, 16>}, {transform_indices = @transform_1, window_bounds = array<i64: 8, 8>}, {pipeline_mode = #tpu.pipeline_mode<synchronous>, transform_indices = @transform_2, window_bounds = array<i64: 16, 32>}, {pipeline_mode = #tpu.pipeline_mode<synchronous>, transform_indices = @transform_3, window_bounds = array<i64: 8, 32>}, {pipeline_mode = #tpu.pipeline_mode<synchronous>, transform_indices = @transform_4, window_bounds = array<i64: 1, 32>}, {pipeline_mode = #tpu.pipeline_mode<synchronous>, transform_indices = @transform_5, window_bounds = array<i64: 32, 32>}, {pipeline_mode = #tpu.pipeline_mode<synchronous>, transform_indices = @transform_6, window_bounds = array<i64: 1, 32>}, {pipeline_mode = #tpu.pipeline_mode<synchronous>, transform_indices = @transform_7, window_bounds = array<i64: 1, 32>}, {transform_indices = @transform_8, window_bounds = array<i64: 1, 1>}, {transform_indices = @transform_9, window_bounds = array<i64: 8, 1>}]} {
    %c0 = arith.constant 0 : index
    %c0_0 = arith.constant 0 : index
    %0 = vector.load %arg1[%c0, %c0_0] : memref<8x16xf32, #tpu.memory_space<vmem>>, vector<8x16xf32>
    %c0_1 = arith.constant 0 : index
    %c0_2 = arith.constant 0 : index
    %1 = vector.load %arg2[%c0_1, %c0_2] : memref<8x8xf32, #tpu.memory_space<vmem>>, vector<8x8xf32>
    %c0_3 = arith.constant 0 : index
    %c0_4 = arith.constant 0 : index
    %2 = vector.load %arg3[%c0_3, %c0_4] : memref<16x32xf32, #tpu.memory_space<vmem>>, vector<16x32xf32>
    %cst = arith.constant dense<0.000000e+00> : vector<8x32xf32>
    %3 = tpu.matmul %0, %2, %cst {dimension_numbers = #tpu.dot_dimension_numbers<[1], [0], [0], [1], [0, 0, 1, 1], [], []>} : vector<8x16xf32>, vector<16x32xf32>, vector<8x32xf32> -> vector<8x32xf32>
    %c0_5 = arith.constant 0 : index
    %c0_6 = arith.constant 0 : index
    %4 = vector.load %arg4[%c0_5, %c0_6] : memref<8x32xf32, #tpu.memory_space<vmem>>, vector<8x32xf32>
    %cst_7 = arith.constant dense<0.000000e+00> : vector<8x32xf32>
    %5 = tpu.matmul %1, %4, %cst_7 {dimension_numbers = #tpu.dot_dimension_numbers<[1], [0], [0], [1], [0, 0, 1, 1], [], []>} : vector<8x8xf32>, vector<8x32xf32>, vector<8x32xf32> -> vector<8x32xf32>
    %6 = arith.addf %3, %5 : vector<8x32xf32>
    %c0_8 = arith.constant 0 : index
    %c0_9 = arith.constant 0 : index
    %7 = vector.load %arg5[%c0_8, %c0_9] : memref<1x32xf32, #tpu.memory_space<vmem>>, vector<1x32xf32>
    %8 = vector.broadcast %7 : vector<1x32xf32> to vector<8x32xf32>
    %9 = arith.addf %6, %8 : vector<8x32xf32>
    %cst_10 = arith.constant 0.000000e+00 : f32
    %10 = vector.broadcast %cst_10 : f32 to vector<8x32xf32>
    %11 = arith.maximumf %9, %10 : vector<8x32xf32>
    %c0_11 = arith.constant 0 : index
    %c0_12 = arith.constant 0 : index
    %12 = vector.load %arg6[%c0_11, %c0_12] : memref<32x32xf32, #tpu.memory_space<vmem>>, vector<32x32xf32>
    %cst_13 = arith.constant dense<0.000000e+00> : vector<8x32xf32>
    %13 = tpu.matmul %11, %12, %cst_13 {dimension_numbers = #tpu.dot_dimension_numbers<[1], [0], [0], [1], [0, 0, 1, 1], [], []>} : vector<8x32xf32>, vector<32x32xf32>, vector<8x32xf32> -> vector<8x32xf32>
    %c0_14 = arith.constant 0 : index
    %c0_15 = arith.constant 0 : index
    %14 = vector.load %arg7[%c0_14, %c0_15] : memref<1x32xf32, #tpu.memory_space<vmem>>, vector<1x32xf32>
    %15 = vector.broadcast %14 : vector<1x32xf32> to vector<8x32xf32>
    %16 = arith.addf %13, %15 : vector<8x32xf32>
    %cst_16 = arith.constant 0.000000e+00 : f32
    %17 = vector.broadcast %cst_16 : f32 to vector<8x32xf32>
    %18 = arith.maximumf %16, %17 : vector<8x32xf32>
    %c0_17 = arith.constant 0 : index
    %c0_18 = arith.constant 0 : index
    %19 = vector.load %arg8[%c0_17, %c0_18] : memref<1x32xf32, #tpu.memory_space<vmem>>, vector<1x32xf32>
    %20 = vector.broadcast %19 : vector<1x32xf32> to vector<8x32xf32>
    %21 = arith.mulf %18, %20 : vector<8x32xf32>
    %cst_19 = arith.constant dense<0.000000e+00> : vector<8xf32>
    %22 = vector.multi_reduction <add>, %21, %cst_19 [1] : vector<8x32xf32> to vector<8xf32>
    %23 = vector.shape_cast %22 : vector<8xf32> to vector<8x1xf32>
    %c0_20 = arith.constant 0 : index
    %c0_21 = arith.constant 0 : index
    %24 = memref.load %arg9[%c0_20, %c0_21] : memref<1x1xf32, #tpu.memory_space<smem>>
    %25 = vector.broadcast %24 : f32 to vector<8x1xf32>
    %26 = arith.addf %23, %25 : vector<8x1xf32>
    %c0_22 = arith.constant 0 : index
    %c0_23 = arith.constant 0 : index
    %27 = vector.load %arg10[%c0_22, %c0_23] : memref<8x1xf32, #tpu.memory_space<vmem>>, vector<8x1xf32>
    tpu.vector_store %arg10[%c0_22, %c0_23], %26 {strides = array<i32>} : memref<8x1xf32, #tpu.memory_space<vmem>>, vector<8x1xf32>,
    return
  }
  func.func @transform_0(%arg0: i32) -> (i32, i32) {
    %c0_i32 = arith.constant 0 : i32
    %c0_i32_0 = arith.constant 0 : i32
    return %arg0, %c0_i32 : i32, i32
  }
  func.func @transform_1(%arg0: i32) -> (i32, i32) {
    %c0_i32 = arith.constant 0 : i32
    %c0_i32_0 = arith.constant 0 : i32
    return %arg0, %c0_i32 : i32, i32
  }
  func.func @transform_2(%arg0: i32) -> (i32, i32) {
    %c0_i32 = arith.constant 0 : i32
    %c0_i32_0 = arith.constant 0 : i32
    %c0_i32_1 = arith.constant 0 : i32
    return %c0_i32, %c0_i32_0 : i32, i32
  }
  func.func @transform_3(%arg0: i32) -> (i32, i32) {
    %c0_i32 = arith.constant 0 : i32
    %c0_i32_0 = arith.constant 0 : i32
    %c0_i32_1 = arith.constant 0 : i32
    return %c0_i32, %c0_i32_0 : i32, i32
  }
  func.func @transform_4(%arg0: i32) -> (i32, i32) {
    %c0_i32 = arith.constant 0 : i32
    %c0_i32_0 = arith.constant 0 : i32
    %c0_i32_1 = arith.constant 0 : i32
    return %c0_i32, %c0_i32_0 : i32, i32
  }
  func.func @transform_5(%arg0: i32) -> (i32, i32) {
    %c0_i32 = arith.constant 0 : i32
    %c0_i32_0 = arith.constant 0 : i32
    %c0_i32_1 = arith.constant 0 : i32
    return %c0_i32, %c0_i32_0 : i32, i32
  }
  func.func @transform_6(%arg0: i32) -> (i32, i32) {
    %c0_i32 = arith.constant 0 : i32
    %c0_i32_0 = arith.constant 0 : i32
    %c0_i32_1 = arith.constant 0 : i32
    return %c0_i32, %c0_i32_0 : i32, i32
  }
  func.func @transform_7(%arg0: i32) -> (i32, i32) {
    %c0_i32 = arith.constant 0 : i32
    %c0_i32_0 = arith.constant 0 : i32
    %c0_i32_1 = arith.constant 0 : i32
    return %c0_i32, %c0_i32_0 : i32, i32
  }
  func.func @transform_8(%arg0: i32) -> (i32, i32) {
    %c0_i32 = arith.constant 0 : i32
    %c0_i32_0 = arith.constant 0 : i32
    %c0_i32_1 = arith.constant 0 : i32
    return %c0_i32, %c0_i32_0 : i32, i32
  }
  func.func @transform_9(%arg0: i32) -> (i32, i32) {
    %c0_i32 = arith.constant 0 : i32
    %c0_i32_0 = arith.constant 0 : i32
    return %arg0, %c0_i32 : i32, i32
  }
}

</mosaic_0001>

<llo_original>
// kernel: tpu_custom_call.1
$region0: #{tpu_custom_call.1}
  #allocation0 [shape = 'u32[]', space=smem, size = 0x4, offset = 0x4, fixed_abs, tag = 'smem constant byte address 0x4 - core index']
  #allocation1 [shape = 'u32[144,128]{1,0:T(1,128)}', space=vmem, size = 0x12000, scoped, tag = 'internal scratch']
  #allocation2 [shape = 'f32[1,1]{1,0:T(1,128)S(6)}', space=smem, size = 0x200, scoped, tag = 'scoped memory for tpu_custom_call.1']
  %s0 = inlined_call_operand.hbm [shape: f32[8,16], index: 0, kind: input, shape index: {}]
  %s1 = inlined_call_operand.hbm [shape: f32[8,8], index: 1, kind: input, shape index: {}]
  %s2 = inlined_call_operand.hbm [shape: f32[16,32], index: 2, kind: input, shape index: {}]
  %s3 = inlined_call_operand.hbm [shape: f32[8,32], index: 3, kind: input, shape index: {}]
  %s4 = inlined_call_operand.vmem [shape: f32[1,32], index: 4, kind: input, shape index: {}]
  %s5 = inlined_call_operand.hbm [shape: f32[32,32], index: 5, kind: input, shape index: {}]
  %s6 = inlined_call_operand.vmem [shape: f32[1,32], index: 6, kind: input, shape index: {}]
  %s7 = inlined_call_operand.vmem [shape: f32[1,32], index: 7, kind: input, shape index: {}]
  %s8 = inlined_call_operand.<no memory space> [shape: f32[1,1], index: 8, kind: input, shape index: {}]
  %s9 = inlined_call_operand.vmem [shape: f32[8,1], index: 9, kind: output, shape index: {}]
  %s10 = sld [smem:[#allocation0]]
  $region66: #{tpu_custom_call.1} parent=0
    _
  %s12 = ssub.s32 1, %s10
  %s13 = scalar_select 0, %s12, %s10
  %14 = sst [smem:[#allocation2]] %s8
  $region1: #{tpu_custom_call.1} parent=0
    #allocation3 [shape = 'u8[4096]{0}', space=vmem, size = 0x1000, scoped, tag = 'input window, operand 0, single buffered']
    #allocation4 [shape = 's32[1]{0}', space=sflag, size = 0x4, scoped, tag = 'scoped memory for tpu_custom_call.1']
    #allocation5 [shape = 'u8[4096]{0}', space=vmem, size = 0x1000, scoped, tag = 'input window, operand 1, single buffered']
    #allocation6 [shape = 's32[1]{0}', space=sflag, size = 0x4, scoped, tag = 'scoped memory for tpu_custom_call.1']
    #allocation7 [shape = 'u8[8192]{0}', space=vmem, size = 0x2000, scoped, tag = 'input window, operand 2, single buffered']
    #allocation8 [shape = 'u8[4096]{0}', space=vmem, size = 0x1000, scoped, tag = 'input window, operand 3, single buffered']
    #allocation9 [shape = 's32[1]{0}', space=sflag, size = 0x4, scoped, tag = 'scoped memory for tpu_custom_call.1']
    #allocation10 [shape = 'u8[16384]{0}', space=vmem, size = 0x4000, scoped, tag = 'input window, operand 5, single buffered']
    %15 = vsyncpa [#allocation4], 0
    %16 = vsyncpa [#allocation6], 0
    %17 = vsyncpa [#allocation9], 0
    // Predicated region
    $region2: #{tpu_custom_call.1} parent=1 // pred_check
      _
    $region3: #{tpu_custom_call.1} parent=1 // pred_check_branch
      %19 = sbr.rel (0) target = $region5
    $region4: #{tpu_custom_call.1} parent=1 // pred_region
      %s21 = ssub.s32 128, 128
      %22 = vsyncadd [#allocation4], %s21
      %s24 = sshll.u32 [#allocation3], 4
      %s25 = int_to_ptr.vmem [resolvable:$true] %s24
      %27 = dma.hbm_to_vmem [thread:$0]  %s0, 128, %s25, [#allocation4]
    $region5: #{tpu_custom_call.1} parent=1 // pred_fallthru
      _
    // Predicated region
    $region6: #{tpu_custom_call.1} parent=1 // pred_check
      _
    $region7: #{tpu_custom_call.1} parent=1 // pred_check_branch
      %29 = sbr.rel (0) target = $region9
    $region8: #{tpu_custom_call.1} parent=1 // pred_region
      %s31 = ssub.s32 128, 128
      %32 = vsyncadd [#allocation6], %s31
      %s34 = sshll.u32 [#allocation5], 4
      %s35 = int_to_ptr.vmem [resolvable:$true] %s34
      %37 = dma.hbm_to_vmem [thread:$0]  %s1, 128, %s35, [#allocation6]
    $region9: #{tpu_custom_call.1} parent=1 // pred_fallthru
      _
    // Predicated region
    $region10: #{tpu_custom_call.1} parent=1 // pred_check
      _
    $region11: #{tpu_custom_call.1} parent=1 // pred_check_branch
      %39 = sbr.rel (0) target = $region13
    $region12: #{tpu_custom_call.1} parent=1 // pred_region
      %s41 = ssub.s32 256, 256
      %42 = vsyncadd [#allocation6], %s41
      %s43 = sshll.u32 [#allocation7], 4
      %s44 = int_to_ptr.vmem [resolvable:$true] %s43
      %49 = dma.hbm_to_vmem [thread:$0]  %s2, 256, %s44, [#allocation6], 128, 128, 8
    $region13: #{tpu_custom_call.1} parent=1 // pred_fallthru
      _
    // Predicated region
    $region14: #{tpu_custom_call.1} parent=1 // pred_check
      _
    $region15: #{tpu_custom_call.1} parent=1 // pred_check_branch
      %51 = sbr.rel (0) target = $region17
    $region16: #{tpu_custom_call.1} parent=1 // pred_region
      %s53 = ssub.s32 128, 128
      %54 = vsyncadd [#allocation9], %s53
      %s56 = sshll.u32 [#allocation8], 4
      %s57 = int_to_ptr.vmem [resolvable:$true] %s56
      %59 = dma.hbm_to_vmem [thread:$0]  %s3, 128, %s57, [#allocation9]
    $region17: #{tpu_custom_call.1} parent=1 // pred_fallthru
      _
    // Predicated region
    $region18: #{tpu_custom_call.1} parent=1 // pred_check
      _
    $region19: #{tpu_custom_call.1} parent=1 // pred_check_branch
      %61 = sbr.rel (0) target = $region21
    $region20: #{tpu_custom_call.1} parent=1 // pred_region
      _
    $region21: #{tpu_custom_call.1} parent=1 // pred_fallthru
      _
    // Predicated region
    $region22: #{tpu_custom_call.1} parent=1 // pred_check
      _
    $region23: #{tpu_custom_call.1} parent=1 // pred_check_branch
      %63 = sbr.rel (0) target = $region25
    $region24: #{tpu_custom_call.1} parent=1 // pred_region
      %s65 = ssub.s32 512, 512
      %66 = vsyncadd [#allocation9], %s65
      %s67 = sshll.u32 [#allocation10], 4
      %s68 = int_to_ptr.vmem [resolvable:$true] %s67
      %73 = dma.hbm_to_vmem [thread:$0]  %s5, 512, %s68, [#allocation9], 128, 128, 8
    $region25: #{tpu_custom_call.1} parent=1 // pred_fallthru
      _
    // Predicated region
    $region26: #{tpu_custom_call.1} parent=1 // pred_check
      _
    $region27: #{tpu_custom_call.1} parent=1 // pred_check_branch
      %75 = sbr.rel (0) target = $region29
    $region28: #{tpu_custom_call.1} parent=1 // pred_region
      _
    $region29: #{tpu_custom_call.1} parent=1 // pred_fallthru
      _
    // Predicated region
    $region30: #{tpu_custom_call.1} parent=1 // pred_check
      _
    $region31: #{tpu_custom_call.1} parent=1 // pred_check_branch
      %77 = sbr.rel (0) target = $region33
    $region32: #{tpu_custom_call.1} parent=1 // pred_region
      _
    $region33: #{tpu_custom_call.1} parent=1 // pred_fallthru
      _
    // Predicated region
    $region34: #{tpu_custom_call.1} parent=1 // pred_check
      _
    $region35: #{tpu_custom_call.1} parent=1 // pred_check_branch
      %79 = sbr.rel (0) target = $region37
    $region36: #{tpu_custom_call.1} parent=1 // pred_region
      _
    $region37: #{tpu_custom_call.1} parent=1 // pred_fallthru
      _
    // Predicated region
    $region38: #{tpu_custom_call.1} parent=1 // pred_check
      _
    $region39: #{tpu_custom_call.1} parent=1 // pred_check_branch
      %81 = sbr.rel (0) target = $region41
    $region40: #{tpu_custom_call.1} parent=1 // pred_region
      %82 = dma.done [#allocation4], 128
    $region41: #{tpu_custom_call.1} parent=1 // pred_fallthru
      _
    // Predicated region
    $region42: #{tpu_custom_call.1} parent=1 // pred_check
      _
    $region43: #{tpu_custom_call.1} parent=1 // pred_check_branch
      %84 = sbr.rel (0) target = $region45
    $region44: #{tpu_custom_call.1} parent=1 // pred_region
      %85 = dma.done [#allocation6], 128
    $region45: #{tpu_custom_call.1} parent=1 // pred_fallthru
      _
    // Predicated region
    $region46: #{tpu_custom_call.1} parent=1 // pred_check
      _
    $region47: #{tpu_custom_call.1} parent=1 // pred_check_branch
      %87 = sbr.rel (0) target = $region49
    $region48: #{tpu_custom_call.1} parent=1 // pred_region
      %88 = dma.done [#allocation6], 256
    $region49: #{tpu_custom_call.1} parent=1 // pred_fallthru
      _
    // Predicated region
    $region50: #{tpu_custom_call.1} parent=1 // pred_check
      _
    $region51: #{tpu_custom_call.1} parent=1 // pred_check_branch
      %90 = sbr.rel (0) target = $region53
    $region52: #{tpu_custom_call.1} parent=1 // pred_region
      %91 = dma.done [#allocation9], 128
    $region53: #{tpu_custom_call.1} parent=1 // pred_fallthru
      _
    // Predicated region
    $region54: #{tpu_custom_call.1} parent=1 // pred_check
      _
    $region55: #{tpu_custom_call.1} parent=1 // pred_check_branch
      %93 = sbr.rel (0) target = $region57
    $region56: #{tpu_custom_call.1} parent=1 // pred_region
      %94 = dma.done [#allocation9], 512
    $region57: #{tpu_custom_call.1} parent=1 // pred_fallthru
      _
    %v95 = vld [vmem:[#allocation3] sm:$0xff]
    %v96 = vld [vmem:[#allocation5] sm:$0xff]
    %v97 = vld [vmem:[#allocation7] sm:$0xff]
    %v98 = vld [vmem:[#allocation7 + $0x8] sm:$0xff]
    %v99 = vld [vmem:[#allocation8] sm:$0xff]
    %vm100 = vcmask 64512
    %v102 = vsel %vm100, %v96, 0
    %104 = vmatprep.subr.mxu0 0.0
    %105 = vmatpush1.msra.mxu0 0.0
    %106 = vmatprep.subr.mxu0 0.0
    %107 = vmatpush1.msra.mxu0 0.0
    %108 = vmatprep.subr.mxu0 0.0
    %109 = vmatpush1.msra.mxu0 0.0
    %110 = vmatprep.subr.mxu0 0.0
    %111 = vmatpush1.msra.mxu0 0.0
    %112 = vmatprep.subr.mxu0 0.0
    %113 = vmatpush1.msra.mxu0 0.0
    %114 = vmatprep.subr.mxu0 0.0
    %115 = vmatpush1.msra.mxu0 0.0
    %116 = vmatprep.subr.mxu0 0.0
    %117 = vmatpush1.msra.mxu0 0.0
    %118 = vmatprep.subr.mxu0 0.0
    %119 = vmatpush1.msra.mxu0 0.0
    %120 = vmatprep.subr.mxu0 0.0
    %121 = vmatpush1.msra.mxu0 0.0
    %122 = vmatprep.subr.mxu0 0.0
    %123 = vmatpush1.msra.mxu0 0.0
    %124 = vmatprep.subr.mxu0 0.0
    %125 = vmatpush1.msra.mxu0 0.0
    %126 = vmatprep.subr.mxu0 0.0
    %127 = vmatpush1.msra.mxu0 0.0
    %128 = vmatprep.subr.mxu0 0.0
    %129 = vmatpush1.msra.mxu0 0.0
    %130 = vmatprep.subr.mxu0 0.0
    %131 = vmatpush1.msra.mxu0 0.0
    %132 = vmatprep.subr.mxu0 0.0
    %133 = vmatpush1.msra.mxu0 0.0
    %134 = vmatprep.subr.mxu0 0.0
    %135 = vmatpush1.msra.mxu0 %v99
    %136 = vmatprep.subr.mxu0 0.0
    %137 = vmatpush2.msra.mxu0 0.0
    %138 = vmatprep.subr.mxu0 0.0
    %139 = vmatpush2.msra.mxu0 0.0
    %140 = vmatprep.subr.mxu0 0.0
    %141 = vmatpush2.msra.mxu0 0.0
    %142 = vmatprep.subr.mxu0 0.0
    %143 = vmatpush2.msra.mxu0 0.0
    %144 = vmatprep.subr.mxu0 0.0
    %145 = vmatpush2.msra.mxu0 0.0
    %146 = vmatprep.subr.mxu0 0.0
    %147 = vmatpush2.msra.mxu0 0.0
    %148 = vmatprep.subr.mxu0 0.0
    %149 = vmatpush2.msra.mxu0 0.0
    %150 = vmatprep.subr.mxu0 0.0
    %151 = vmatpush2.msra.mxu0 0.0
    %152 = vmatprep.subr.mxu0 0.0
    %153 = vmatpush2.msra.mxu0 0.0
    %154 = vmatprep.subr.mxu0 0.0
    %155 = vmatpush2.msra.mxu0 0.0
    %156 = vmatprep.subr.mxu0 0.0
    %157 = vmatpush2.msra.mxu0 0.0
    %158 = vmatprep.subr.mxu0 0.0
    %159 = vmatpush2.msra.mxu0 0.0
    %160 = vmatprep.subr.mxu0 0.0
    %161 = vmatpush2.msra.mxu0 0.0
    %162 = vmatprep.subr.mxu0 0.0
    %163 = vmatpush2.msra.mxu0 0.0
    %164 = vmatprep.subr.mxu0 0.0
    %165 = vmatpush2.msra.mxu0 0.0
    %166 = vmatprep.subr.mxu0 0.0
    %167 = vmatpush2.msra.mxu0 0.0
    %168 = vmatprep.mubr.f32.mxu0 0.0
    %169 = vmatmul.mubr.f32.gmra.mxu0 %v102
    %v170 = vpop.f32.mrf.mxu0
    %v171 = vadd.f32 0.0, %v170
    %v172 = vpop.f32.mrf.mxu0
    %173 = vdwg.mxu0
    %vm174 = vcmask 130048
    %v176 = vsel %vm174, %v95, 0
    %178 = vmatprep.subr.mxu0 0.0
    %179 = vmatpush1.msra.mxu0 0.0
    %180 = vmatprep.subr.mxu0 0.0
    %181 = vmatpush1.msra.mxu0 0.0
    %182 = vmatprep.subr.mxu0 0.0
    %183 = vmatpush1.msra.mxu0 0.0
    %184 = vmatprep.subr.mxu0 0.0
    %185 = vmatpush1.msra.mxu0 0.0
    %186 = vmatprep.subr.mxu0 0.0
    %187 = vmatpush1.msra.mxu0 0.0
    %188 = vmatprep.subr.mxu0 0.0
    %189 = vmatpush1.msra.mxu0 0.0
    %190 = vmatprep.subr.mxu0 0.0
    %191 = vmatpush1.msra.mxu0 0.0
    %192 = vmatprep.subr.mxu0 0.0
    %193 = vmatpush1.msra.mxu0 0.0
    %194 = vmatprep.subr.mxu0 0.0
    %195 = vmatpush1.msra.mxu0 0.0
    %196 = vmatprep.subr.mxu0 0.0
    %197 = vmatpush1.msra.mxu0 0.0
    %198 = vmatprep.subr.mxu0 0.0
    %199 = vmatpush1.msra.mxu0 0.0
    %200 = vmatprep.subr.mxu0 0.0
    %201 = vmatpush1.msra.mxu0 0.0
    %202 = vmatprep.subr.mxu0 0.0
    %203 = vmatpush1.msra.mxu0 0.0
    %204 = vmatprep.subr.mxu0 0.0
    %205 = vmatpush1.msra.mxu0 0.0
    %206 = vmatprep.subr.mxu0 0.0
    %207 = vmatpush1.msra.mxu0 %v98
    %208 = vmatprep.subr.mxu0 0.0
    %209 = vmatpush1.msra.mxu0 %v97
    %210 = vmatprep.subr.mxu0 0.0
    %211 = vmatpush2.msra.mxu0 0.0
    %212 = vmatprep.subr.mxu0 0.0
    %213 = vmatpush2.msra.mxu0 0.0
    %214 = vmatprep.subr.mxu0 0.0
    %215 = vmatpush2.msra.mxu0 0.0
    %216 = vmatprep.subr.mxu0 0.0
    %217 = vmatpush2.msra.mxu0 0.0
    %218 = vmatprep.subr.mxu0 0.0
    %219 = vmatpush2.msra.mxu0 0.0
    %220 = vmatprep.subr.mxu0 0.0
    %221 = vmatpush2.msra.mxu0 0.0
    %222 = vmatprep.subr.mxu0 0.0
    %223 = vmatpush2.msra.mxu0 0.0
    %224 = vmatprep.subr.mxu0 0.0
    %225 = vmatpush2.msra.mxu0 0.0
    %226 = vmatprep.subr.mxu0 0.0
    %227 = vmatpush2.msra.mxu0 0.0
    %228 = vmatprep.subr.mxu0 0.0
    %229 = vmatpush2.msra.mxu0 0.0
    %230 = vmatprep.subr.mxu0 0.0
    %231 = vmatpush2.msra.mxu0 0.0
    %232 = vmatprep.subr.mxu0 0.0
    %233 = vmatpush2.msra.mxu0 0.0
    %234 = vmatprep.subr.mxu0 0.0
    %235 = vmatpush2.msra.mxu0 0.0
    %236 = vmatprep.subr.mxu0 0.0
    %237 = vmatpush2.msra.mxu0 0.0
    %238 = vmatprep.subr.mxu0 0.0
    %239 = vmatpush2.msra.mxu0 0.0
    %240 = vmatprep.subr.mxu0 0.0
    %241 = vmatpush2.msra.mxu0 0.0
    %242 = vmatprep.mubr.f32.mxu0 0.0
    %243 = vmatmul.mubr.f32.gmra.mxu0 %v176
    %v244 = vpop.f32.mrf.mxu0
    %v245 = vadd.f32 %v171, %v244
    %v246 = vpop.f32.mrf.mxu0
    %247 = vdwg.mxu0
    %v248 = vld [vmem:[%s4] sm:$0x1]
    %v250 = vlaneseq
    %v251 = vshrl.u32 %v250, 7
    %v252 = vsub.s32 0, %v251
    %v253 = vrot.slane %v248, %v252
    %v255 = vadd.f32 %v245, %v253
    %v256 = vmax.f32 %v255, 0.0
    %v257 = vld [vmem:[#allocation10] sm:$0xff]
    %v258 = vld [vmem:[#allocation10 + $0x8] sm:$0xff]
    %v259 = vld [vmem:[#allocation10 + $0x10] sm:$0xff]
    %v260 = vld [vmem:[#allocation10 + $0x18] sm:$0xff]
    %v261 = vld [vmem:[%s6] sm:$0x1]
    %v263 = vlaneseq
    %v264 = vshrl.u32 %v263, 7
    %v265 = vsub.s32 0, %v264
    %v266 = vrot.slane %v261, %v265
    %vm268 = vcmask 261120
    %v270 = vsel %vm268, %v256, 0
    %272 = vmatprep.subr.mxu0 0.0
    %273 = vmatpush1.msra.mxu0 0.0
    %274 = vmatprep.subr.mxu0 0.0
    %275 = vmatpush1.msra.mxu0 0.0
    %276 = vmatprep.subr.mxu0 0.0
    %277 = vmatpush1.msra.mxu0 0.0
    %278 = vmatprep.subr.mxu0 0.0
    %279 = vmatpush1.msra.mxu0 0.0
    %280 = vmatprep.subr.mxu0 0.0
    %281 = vmatpush1.msra.mxu0 0.0
    %282 = vmatprep.subr.mxu0 0.0
    %283 = vmatpush1.msra.mxu0 0.0
    %284 = vmatprep.subr.mxu0 0.0
    %285 = vmatpush1.msra.mxu0 0.0
    %286 = vmatprep.subr.mxu0 0.0
    %287 = vmatpush1.msra.mxu0 0.0
    %288 = vmatprep.subr.mxu0 0.0
    %289 = vmatpush1.msra.mxu0 0.0
    %290 = vmatprep.subr.mxu0 0.0
    %291 = vmatpush1.msra.mxu0 0.0
    %292 = vmatprep.subr.mxu0 0.0
    %293 = vmatpush1.msra.mxu0 0.0
    %294 = vmatprep.subr.mxu0 0.0
    %295 = vmatpush1.msra.mxu0 0.0
    %296 = vmatprep.subr.mxu0 0.0
    %297 = vmatpush1.msra.mxu0 %v260
    %298 = vmatprep.subr.mxu0 0.0
    %299 = vmatpush1.msra.mxu0 %v259
    %300 = vmatprep.subr.mxu0 0.0
    %301 = vmatpush1.msra.mxu0 %v258
    %302 = vmatprep.subr.mxu0 0.0
    %303 = vmatpush1.msra.mxu0 %v257
    %304 = vmatprep.subr.mxu0 0.0
    %305 = vmatpush2.msra.mxu0 0.0
    %306 = vmatprep.subr.mxu0 0.0
    %307 = vmatpush2.msra.mxu0 0.0
    %308 = vmatprep.subr.mxu0 0.0
    %309 = vmatpush2.msra.mxu0 0.0
    %310 = vmatprep.subr.mxu0 0.0
    %311 = vmatpush2.msra.mxu0 0.0
    %312 = vmatprep.subr.mxu0 0.0
    %313 = vmatpush2.msra.mxu0 0.0
    %314 = vmatprep.subr.mxu0 0.0
    %315 = vmatpush2.msra.mxu0 0.0
    %316 = vmatprep.subr.mxu0 0.0
    %317 = vmatpush2.msra.mxu0 0.0
    %318 = vmatprep.subr.mxu0 0.0
    %319 = vmatpush2.msra.mxu0 0.0
    %320 = vmatprep.subr.mxu0 0.0
    %321 = vmatpush2.msra.mxu0 0.0
    %322 = vmatprep.subr.mxu0 0.0
    %323 = vmatpush2.msra.mxu0 0.0
    %324 = vmatprep.subr.mxu0 0.0
    %325 = vmatpush2.msra.mxu0 0.0
    %326 = vmatprep.subr.mxu0 0.0
    %327 = vmatpush2.msra.mxu0 0.0
    %328 = vmatprep.subr.mxu0 0.0
    %329 = vmatpush2.msra.mxu0 0.0
    %330 = vmatprep.subr.mxu0 0.0
    %331 = vmatpush2.msra.mxu0 0.0
    %332 = vmatprep.subr.mxu0 0.0
    %333 = vmatpush2.msra.mxu0 0.0
    %334 = vmatprep.subr.mxu0 0.0
    %335 = vmatpush2.msra.mxu0 0.0
    %336 = vmatprep.mubr.f32.mxu0 0.0
    %337 = vmatmul.mubr.f32.gmra.mxu0 %v270
    %v338 = vpop.f32.mrf.mxu0
    %v339 = vadd.f32 %v266, %v338
    %v340 = vpop.f32.mrf.mxu0
    %341 = vdwg.mxu0
    %v342 = vmax.f32 %v339, 0.0
    %v343 = vld [vmem:[%s7] sm:$0x1]
    %v345 = vlaneseq
    %v346 = vshrl.u32 %v345, 7
    %v347 = vsub.s32 0, %v346
    %v348 = vrot.slane %v343, %v347
    %v350 = vmul.f32 %v342, %v348
    %v351 = vsel %vm268, %v350, 0.0
    %352 = vadd.xlane.f32.xlu0 %v351
    %v353 = vpop.xlane.xlu0 %352
    %s354 = sld [smem:[#allocation2]]
    %v355 = vstv %s354
    %v356 = vadd.f32 %v353, %v355
    %vm357 = vcmask 7168
    %358 = vst.msk [vmem:[%s9] sm:$0xff] %vm357, %v356
    // Predicated region
    $region58: #{tpu_custom_call.1} parent=1 // pred_check
      _
    $region59: #{tpu_custom_call.1} parent=1 // pred_check_branch
      %360 = sbr.rel (0) target = $region61
    $region60: #{tpu_custom_call.1} parent=1 // pred_region
      _
    $region61: #{tpu_custom_call.1} parent=1 // pred_fallthru
      _
    // Predicated region
    $region62: #{tpu_custom_call.1} parent=1 // pred_check
      _
    $region63: #{tpu_custom_call.1} parent=1 // pred_check_branch
      %362 = sbr.rel (0) target = $region65
    $region64: #{tpu_custom_call.1} parent=1 // pred_region
      _
    $region65: #{tpu_custom_call.1} parent=1 // pred_fallthru
      _
    %363 = vsyncpa [#allocation4], 1
    %364 = vsyncpa [#allocation6], 1
    %365 = vsyncpa [#allocation9], 1

</llo_original>
